<compile_context>
chip_gen: v7x
topology: tpu7x:2x2x1
jax: 0.10.0
libtpu: 0.0.40
codegen_flags: <defaults>
</compile_context>

<pallas_src>
import jax
import jax.numpy as jnp
from jax.experimental import pallas as pl
from jax.experimental.pallas import tpu as pltpu


def gat_fused_kernel(s_ref, r_ref, e_ref, sidx_ref,
                     wf_ref, ws_ref, wr_ref, we_ref, ba_ref, out_ref):
    # s_ref / r_ref : [M, D]   gathered sender / receiver node features
    # e_ref         : [M, Ed]  edge features
    # sidx_ref      : [1, M]   int32 sender node index per edge
    # wf_ref        : [D, H*Oh] all heads' f_edge weights (head-major columns)
    # ws_ref        : [D, H]    folded Wf[h] @ Wa_sender[h]
    # wr_ref        : [D, H]    folded Wf[h] @ Wa_receiver[h]
    # we_ref        : [Ed, H]   Wa_edge per head
    # ba_ref        : [1, H]    attention bias per head
    # out_ref       : [N, H*Oh] concatenated-heads output for this batch
    s = s_ref[...].astype(jnp.float32)
    r = r_ref[...].astype(jnp.float32)
    e = e_ref[...].astype(jnp.float32)

    M = s.shape[0]
    N = out_ref.shape[0]
    HOh = out_ref.shape[-1]
    H = ws_ref.shape[-1]
    Oh = HOh // H

    # f_edge projection of senders, all heads at once: [M, H*Oh]
    h_s = jnp.dot(s, wf_ref[...], preferred_element_type=jnp.float32)

    # attention logits for every head in one pass (Wa_sender/Wa_receiver folded
    # into node space in the wrapper, so h_receiver is never computed): [M, H]
    att = (jnp.dot(s, ws_ref[...], preferred_element_type=jnp.float32)
           + jnp.dot(r, wr_ref[...], preferred_element_type=jnp.float32)
           + jnp.dot(e, we_ref[...], preferred_element_type=jnp.float32)
           + ba_ref[...])
    att = jnp.where(att > 0, att, 0.2 * att)                      # LeakyReLU(0.2)
    # exp(att - max over the edge dim), per head (torch.max(dim=1, keepdim=True))
    att = jnp.exp(att - jnp.max(att, axis=0, keepdims=True))      # [M, H]

    # head -> column expansion matrix [H, H*Oh]: column j belongs to head j//Oh
    col_iota = jax.lax.broadcasted_iota(jnp.int32, (H, HOh), 1)
    row_iota = jax.lax.broadcasted_iota(jnp.int32, (H, HOh), 0)
    expand = ((col_iota >= row_iota * Oh)
              & (col_iota < (row_iota + 1) * Oh)).astype(jnp.float32)

    att_exp = jnp.dot(att, expand, preferred_element_type=jnp.float32)  # [M, H*Oh]

    # fused scatter values: [ att*h_s | att ]  -> one [N,M]@[M,H*Oh+H] matmul
    vals = jnp.concatenate([att_exp * h_s, att], axis=-1)               # [M, H*Oh+H]

    sidx = sidx_ref[...]                                                # [1, M]
    # scatter_sum over sender index expressed as a one-hot matmul (MXU-friendly)
    # (cast one-hot/values to bf16 for large graphs; kept f32 here for exactness)
    onehot = (jax.lax.broadcasted_iota(jnp.int32, (N, M), 0)
              == sidx).astype(jnp.float32)                              # [N, M]

    scat = jnp.dot(onehot, vals, preferred_element_type=jnp.float32)    # [N, H*Oh+H]
    num = scat[:, :HOh]                                                 # [N, H*Oh]
    den = scat[:, HOh:]                                                 # [N, H]
    den_exp = jnp.dot(den, expand, preferred_element_type=jnp.float32)  # [N, H*Oh]

    out_ref[...] = (num / (den_exp + 1e-8)).astype(out_ref.dtype)


def multi_head_gat(V, E, edges, params):
    """Pallas multiHeadGAT forward. Returns [B, N, n_heads * Oh]."""
    Wf, Was, War, Wae, ba = params   # [H,D,Oh],[H,Oh,1],[H,Oh,1],[H,Ed,1],[H,1,1]
    B, N, D = V.shape
    M = edges.shape[1]
    H, _, Oh = Wf.shape
    Ed = E.shape[-1]

    sidx = edges[..., 0].astype(jnp.int32)
    ridx = edges[..., 1].astype(jnp.int32)
    # torch.gather(V, -2, idx) : row gather (plain-JAX glue)
    senders = jnp.take_along_axis(
        V, jnp.broadcast_to(sidx[..., None], (B, M, D)), axis=1)
    receivers = jnp.take_along_axis(
        V, jnp.broadcast_to(ridx[..., None], (B, M, D)), axis=1)
    sidx_row = sidx.reshape(B, 1, M)

    # Fold / stack per-head weights (tiny, done once per call in XLA):
    #   Wf_all[:, h*Oh:(h+1)*Oh] = Wf[h]                  -> [D, H*Oh]
    #   Ws_att[:, h] = Wf[h] @ Wa_sender[h]               -> [D, H]
    #   Wr_att[:, h] = Wf[h] @ Wa_receiver[h]             -> [D, H]
    #   We_att[:, h] = Wa_edge[h]                         -> [Ed, H]
    Wf_all = jnp.transpose(Wf, (1, 0, 2)).reshape(D, H * Oh)
    Ws_att = jnp.einsum('hdo,ho->dh', Wf, Was[..., 0])
    Wr_att = jnp.einsum('hdo,ho->dh', Wf, War[..., 0])
    We_att = jnp.transpose(Wae[..., 0], (1, 0))
    b_att = ba.reshape(1, H)

    # TODO(synk): for large N*M (v7x 64 MiB VMEM) tile the edge dim M as an
    # "arbitrary" reduction axis with scratch accumulators and a two-pass max.
    out = pl.pallas_call(
        gat_fused_kernel,
        out_shape=jax.ShapeDtypeStruct((B, N, H * Oh), jnp.float32),
        grid=(B,),
        in_specs=[
            pl.BlockSpec((None, M, D), lambda b: (b, 0, 0)),     # senders
            pl.BlockSpec((None, M, D), lambda b: (b, 0, 0)),     # receivers
            pl.BlockSpec((None, M, Ed), lambda b: (b, 0, 0)),    # E
            pl.BlockSpec((None, 1, M), lambda b: (b, 0, 0)),     # sender idx
            pl.BlockSpec((D, H * Oh), lambda b: (0, 0)),         # Wf_all
            pl.BlockSpec((D, H), lambda b: (0, 0)),              # folded Wa_sender
            pl.BlockSpec((D, H), lambda b: (0, 0)),              # folded Wa_receiver
            pl.BlockSpec((Ed, H), lambda b: (0, 0)),             # Wa_edge
            pl.BlockSpec((1, H), lambda b: (0, 0)),              # attention bias
        ],
        out_specs=pl.BlockSpec((None, N, H * Oh), lambda b: (b, 0, 0)),
        compiler_params=pltpu.CompilerParams(
            dimension_semantics=("parallel",),
            vmem_limit_bytes=32 * 1024 * 1024),
    )(senders, receivers, E, sidx_row, Wf_all, Ws_att, Wr_att, We_att, b_att)

    return out   # already [B, N, H*Oh] — no transpose/reshape pass needed


def reference_multi_head_gat(V, E, edges, params):
    """Pure-JAX reference matching the PyTorch semantics (scatter size = N)."""
    Wf, Was, War, Wae, ba = params
    B, N, D = V.shape
    M = edges.shape[1]
    H, _, Oh = Wf.shape
    sidx = edges[..., 0].astype(jnp.int32)
    ridx = edges[..., 1].astype(jnp.int32)
    senders = jnp.take_along_axis(
        V, jnp.broadcast_to(sidx[..., None], (B, M, D)), axis=1)
    receivers = jnp.take_along_axis(
        V, jnp.broadcast_to(ridx[..., None], (B, M, D)), axis=1)
    outs = []
    for h in range(H):
        hs = senders @ Wf[h]
        hr = receivers @ Wf[h]
        att = hs @ Was[h] + hr @ War[h] + E @ Wae[h] + ba[h][0, 0]
        att = jnp.where(att > 0, att, 0.2 * att)
        att = jnp.exp(att - jnp.max(att, axis=1, keepdims=True))
        onehot = (sidx[..., None] == jnp.arange(N)[None, None, :]).astype(jnp.float32)
        num = jnp.einsum('bmn,bmo->bno', onehot, att * hs)
        den = jnp.einsum('bmn,bmo->bno', onehot, att)
        outs.append(num / (den + 1e-8))
    return jnp.concatenate(outs, axis=-1)


def init_params(key, node_size, output_size, n_heads, edge_dim=128):
    # deterministic synthetic init (shapes follow the nn.Module __init__)
    assert output_size % n_heads == 0
    oh = output_size // n_heads
    k1, k2, k3, k4, k5 = jax.random.split(key, 5)
    scale = 0.1
    Wf = scale * jax.random.normal(k1, (n_heads, node_size, oh), jnp.float32)
    Was = scale * jax.random.normal(k2, (n_heads, oh, 1), jnp.float32)
    War = scale * jax.random.normal(k3, (n_heads, oh, 1), jnp.float32)
    Wae = scale * jax.random.normal(k4, (n_heads, edge_dim, 1), jnp.float32)
    ba = scale * jax.random.normal(k5, (n_heads, 1, 1), jnp.float32)
    return (Wf, Was, War, Wae, ba)


if __name__ == "__main__":
    B, N, M = 2, 16, 32
    node_size, output_size, n_heads = 8, 8, 2
    edge_dim = 128  # fixed by the module (attention input = 2*Oh + 128)

    key = jax.random.PRNGKey(0)
    kv, ke, kedges, kp = jax.random.split(key, 4)
    V = jax.random.normal(kv, (B, N, node_size), jnp.float32)
    E = jax.random.normal(ke, (B, M, edge_dim), jnp.float32)
    edges = jax.random.randint(kedges, (B, M, 2), 0, N, jnp.int32)
    params = init_params(kp, node_size, output_size, n_heads, edge_dim)

    # TODO(synk): torch_scatter.scatter_sum infers dim_size = max(index)+1;
    # here the scatter size is fixed to N (the node count of V).

    out = jax.jit(multi_head_gat)(V, E, edges, params)
    out = jax.block_until_ready(out)

    ref = reference_multi_head_gat(V, E, edges, params)
    assert out.shape == (B, N, output_size)
    assert jnp.allclose(out, ref, rtol=1e-3, atol=1e-4), "mismatch vs JAX reference"

    print("KERNEL_OK")
</pallas_src>

<mosaic_0001>
module attributes {stable_mosaic.version = 11 : i64} {
  func.func @gat_fused_kernel(%arg0: i32, %arg1: memref<1x32x8xf32, #tpu.memory_space<vmem>>, %arg2: memref<1x32x8xf32, #tpu.memory_space<vmem>>, %arg3: memref<1x32x128xf32, #tpu.memory_space<vmem>>, %arg4: memref<1x1x32xi32, #tpu.memory_space<vmem>>, %arg5: memref<8x8xf32, #tpu.memory_space<vmem>>, %arg6: memref<8x2xf32, #tpu.memory_space<vmem>>, %arg7: memref<8x2xf32, #tpu.memory_space<vmem>>, %arg8: memref<128x2xf32, #tpu.memory_space<vmem>>, %arg9: memref<1x2xf32, #tpu.memory_space<vmem>>, %arg10: memref<1x16x8xf32, #tpu.memory_space<vmem>>) attributes {dimension_semantics = [#tpu.dimension_semantics<parallel>], iteration_bounds = array<i64: 2>, scalar_prefetch = 0 : i64, scratch_operands = 0 : i64, tpu.core_type = #tpu.core_type<tc>, window_params = [{transform_indices = @transform_0, window_bounds = array<i64: 1, 32, 8>}, {transform_indices = @transform_1, window_bounds = array<i64: 1, 32, 8>}, {transform_indices = @transform_2, window_bounds = array<i64: 1, 32, 128>}, {transform_indices = @transform_3, window_bounds = array<i64: 1, 1, 32>}, {pipeline_mode = #tpu.pipeline_mode<synchronous>, transform_indices = @transform_4, window_bounds = array<i64: 8, 8>}, {pipeline_mode = #tpu.pipeline_mode<synchronous>, transform_indices = @transform_5, window_bounds = array<i64: 8, 2>}, {pipeline_mode = #tpu.pipeline_mode<synchronous>, transform_indices = @transform_6, window_bounds = array<i64: 8, 2>}, {pipeline_mode = #tpu.pipeline_mode<synchronous>, transform_indices = @transform_7, window_bounds = array<i64: 128, 2>}, {pipeline_mode = #tpu.pipeline_mode<synchronous>, transform_indices = @transform_8, window_bounds = array<i64: 1, 2>}, {transform_indices = @transform_9, window_bounds = array<i64: 1, 16, 8>}]} {
    %c0 = arith.constant 0 : index
    %c0_0 = arith.constant 0 : index
    %c0_1 = arith.constant 0 : index
    %0 = vector.load %arg1[%c0, %c0_0, %c0_1] : memref<1x32x8xf32, #tpu.memory_space<vmem>>, vector<1x32x8xf32>
    %1 = vector.shape_cast %0 : vector<1x32x8xf32> to vector<32x8xf32>
    %c0_2 = arith.constant 0 : index
    %c0_3 = arith.constant 0 : index
    %c0_4 = arith.constant 0 : index
    %2 = vector.load %arg2[%c0_2, %c0_3, %c0_4] : memref<1x32x8xf32, #tpu.memory_space<vmem>>, vector<1x32x8xf32>
    %3 = vector.shape_cast %2 : vector<1x32x8xf32> to vector<32x8xf32>
    %c0_5 = arith.constant 0 : index
    %c0_6 = arith.constant 0 : index
    %c0_7 = arith.constant 0 : index
    %4 = vector.load %arg3[%c0_5, %c0_6, %c0_7] : memref<1x32x128xf32, #tpu.memory_space<vmem>>, vector<1x32x128xf32>
    %5 = vector.shape_cast %4 : vector<1x32x128xf32> to vector<32x128xf32>
    %c0_8 = arith.constant 0 : index
    %c0_9 = arith.constant 0 : index
    %6 = vector.load %arg5[%c0_8, %c0_9] : memref<8x8xf32, #tpu.memory_space<vmem>>, vector<8x8xf32>
    %cst = arith.constant dense<0.000000e+00> : vector<32x8xf32>
    %7 = tpu.matmul %1, %6, %cst {dimension_numbers = #tpu.dot_dimension_numbers<[1], [0], [0], [1], [0, 0, 1, 1], [], []>} : vector<32x8xf32>, vector<8x8xf32>, vector<32x8xf32> -> vector<32x8xf32>
    %c0_10 = arith.constant 0 : index
    %c0_11 = arith.constant 0 : index
    %8 = vector.load %arg6[%c0_10, %c0_11] : memref<8x2xf32, #tpu.memory_space<vmem>>, vector<8x2xf32>
    %cst_12 = arith.constant dense<0.000000e+00> : vector<32x2xf32>
    %9 = tpu.matmul %1, %8, %cst_12 {dimension_numbers = #tpu.dot_dimension_numbers<[1], [0], [0], [1], [0, 0, 1, 1], [], []>} : vector<32x8xf32>, vector<8x2xf32>, vector<32x2xf32> -> vector<32x2xf32>
    %c0_13 = arith.constant 0 : index
    %c0_14 = arith.constant 0 : index
    %10 = vector.load %arg7[%c0_13, %c0_14] : memref<8x2xf32, #tpu.memory_space<vmem>>, vector<8x2xf32>
    %cst_15 = arith.constant dense<0.000000e+00> : vector<32x2xf32>
    %11 = tpu.matmul %3, %10, %cst_15 {dimension_numbers = #tpu.dot_dimension_numbers<[1], [0], [0], [1], [0, 0, 1, 1], [], []>} : vector<32x8xf32>, vector<8x2xf32>, vector<32x2xf32> -> vector<32x2xf32>
    %12 = arith.addf %9, %11 : vector<32x2xf32>
    %c0_16 = arith.constant 0 : index
    %c0_17 = arith.constant 0 : index
    %13 = vector.load %arg8[%c0_16, %c0_17] : memref<128x2xf32, #tpu.memory_space<vmem>>, vector<128x2xf32>
    %cst_18 = arith.constant dense<0.000000e+00> : vector<32x2xf32>
    %14 = tpu.matmul %5, %13, %cst_18 {dimension_numbers = #tpu.dot_dimension_numbers<[1], [0], [0], [1], [0, 0, 1, 1], [], []>} : vector<32x128xf32>, vector<128x2xf32>, vector<32x2xf32> -> vector<32x2xf32>
    %15 = arith.addf %12, %14 : vector<32x2xf32>
    %c0_19 = arith.constant 0 : index
    %c0_20 = arith.constant 0 : index
    %16 = vector.load %arg9[%c0_19, %c0_20] : memref<1x2xf32, #tpu.memory_space<vmem>>, vector<1x2xf32>
    %17 = vector.broadcast %16 : vector<1x2xf32> to vector<32x2xf32>
    %18 = arith.addf %15, %17 : vector<32x2xf32>
    %cst_21 = arith.constant 0.000000e+00 : f32
    %19 = vector.broadcast %cst_21 : f32 to vector<32x2xf32>
    %20 = arith.cmpf ogt, %18, %19 : vector<32x2xf32>
    %cst_22 = arith.constant 2.000000e-01 : f32
    %21 = vector.broadcast %cst_22 : f32 to vector<32x2xf32>
    %22 = arith.mulf %21, %18 : vector<32x2xf32>
    %23 = arith.select %20, %18, %22 : vector<32x2xi1>, vector<32x2xf32>
    %cst_23 = arith.constant dense<0xFF800000> : vector<2xf32>
    %24 = vector.multi_reduction <maximumf>, %23, %cst_23 [0] : vector<32x2xf32> to vector<2xf32>
    %25 = vector.shape_cast %24 : vector<2xf32> to vector<1x2xf32>
    %26 = vector.broadcast %25 : vector<1x2xf32> to vector<32x2xf32>
    %27 = arith.subf %23, %26 : vector<32x2xf32>
    %28 = math.exp %27 : vector<32x2xf32>
    %29 = tpu.iota {dimensions = array<i32: 1>} : vector<2x8xi32>
    %30 = tpu.iota {dimensions = array<i32: 0>} : vector<2x8xi32>
    %c4_i32 = arith.constant 4 : i32
    %31 = vector.broadcast %c4_i32 : i32 to vector<2x8xi32>
    %32 = arith.muli %30, %31 : vector<2x8xi32>
    %33 = arith.cmpi sge, %29, %32 : vector<2x8xi32>
    %c1_i32 = arith.constant 1 : i32
    %34 = vector.broadcast %c1_i32 : i32 to vector<2x8xi32>
    %35 = arith.addi %30, %34 : vector<2x8xi32>
    %c4_i32_24 = arith.constant 4 : i32
    %36 = vector.broadcast %c4_i32_24 : i32 to vector<2x8xi32>
    %37 = arith.muli %35, %36 : vector<2x8xi32>
    %38 = arith.cmpi slt, %29, %37 : vector<2x8xi32>
    %39 = arith.andi %33, %38 : vector<2x8xi1>
    %40 = arith.extui %39 : vector<2x8xi1> to vector<2x8xi32>
    %41 = arith.sitofp %40 : vector<2x8xi32> to vector<2x8xf32>
    %cst_25 = arith.constant dense<0.000000e+00> : vector<32x8xf32>
    %42 = tpu.matmul %28, %41, %cst_25 {dimension_numbers = #tpu.dot_dimension_numbers<[1], [0], [0], [1], [0, 0, 1, 1], [], []>} : vector<32x2xf32>, vector<2x8xf32>, vector<32x8xf32> -> vector<32x8xf32>
    %43 = arith.mulf %42, %7 : vector<32x8xf32>
    %44 = tpu.concatenate %43, %28 in 1 : vector<32x8xf32>, vector<32x2xf32> -> vector<32x10xf32>
    %c0_26 = arith.constant 0 : index
    %c0_27 = arith.constant 0 : index
    %c0_28 = arith.constant 0 : index
    %45 = vector.load %arg4[%c0_26, %c0_27, %c0_28] : memref<1x1x32xi32, #tpu.memory_space<vmem>>, vector<1x1x32xi32>
    %46 = vector.shape_cast %45 : vector<1x1x32xi32> to vector<1x32xi32>
    %47 = tpu.iota {dimensions = array<i32: 0>} : vector<16x32xi32>
    %48 = vector.broadcast %46 : vector<1x32xi32> to vector<16x32xi32>
    %49 = arith.cmpi eq, %47, %48 : vector<16x32xi32>
    %50 = arith.extui %49 : vector<16x32xi1> to vector<16x32xi32>
    %51 = arith.sitofp %50 : vector<16x32xi32> to vector<16x32xf32>
    %cst_29 = arith.constant dense<0.000000e+00> : vector<16x10xf32>
    %52 = tpu.matmul %51, %44, %cst_29 {dimension_numbers = #tpu.dot_dimension_numbers<[1], [0], [0], [1], [0, 0, 1, 1], [], []>} : vector<16x32xf32>, vector<32x10xf32>, vector<16x10xf32> -> vector<16x10xf32>
    %53 = vector.extract_strided_slice %52 {offsets = [0, 0], sizes = [16, 8], strides = [1, 1]} : vector<16x10xf32> to vector<16x8xf32>
    %54 = vector.extract_strided_slice %52 {offsets = [0, 8], sizes = [16, 2], strides = [1, 1]} : vector<16x10xf32> to vector<16x2xf32>
    %cst_30 = arith.constant dense<0.000000e+00> : vector<16x8xf32>
    %55 = tpu.matmul %54, %41, %cst_30 {dimension_numbers = #tpu.dot_dimension_numbers<[1], [0], [0], [1], [0, 0, 1, 1], [], []>} : vector<16x2xf32>, vector<2x8xf32>, vector<16x8xf32> -> vector<16x8xf32>
    %cst_31 = arith.constant 9.99999993E-9 : f32
    %56 = vector.broadcast %cst_31 : f32 to vector<16x8xf32>
    %57 = arith.addf %55, %56 : vector<16x8xf32>
    %58 = arith.divf %53, %57 : vector<16x8xf32>
    %c0_32 = arith.constant 0 : index
    %c0_33 = arith.constant 0 : index
    %c0_34 = arith.constant 0 : index
    %59 = vector.load %arg10[%c0_32, %c0_33, %c0_34] : memref<1x16x8xf32, #tpu.memory_space<vmem>>, vector<1x16x8xf32>
    %60 = vector.shape_cast %59 : vector<1x16x8xf32> to vector<16x8xf32>
    %61 = vector.shape_cast %58 : vector<16x8xf32> to vector<1x16x8xf32>
    tpu.vector_store %arg10[%c0_32, %c0_33, %c0_34], %61 {strides = array<i32>} : memref<1x16x8xf32, #tpu.memory_space<vmem>>, vector<1x16x8xf32>,
    return
  }
  func.func @transform_0(%arg0: i32) -> (i32, i32, i32) {
    %c0_i32 = arith.constant 0 : i32
    %c0_i32_0 = arith.constant 0 : i32
    %c0_i32_1 = arith.constant 0 : i32
    return %arg0, %c0_i32, %c0_i32_0 : i32, i32, i32
  }
  func.func @transform_1(%arg0: i32) -> (i32, i32, i32) {
    %c0_i32 = arith.constant 0 : i32
    %c0_i32_0 = arith.constant 0 : i32
    %c0_i32_1 = arith.constant 0 : i32
    return %arg0, %c0_i32, %c0_i32_0 : i32, i32, i32
  }
  func.func @transform_2(%arg0: i32) -> (i32, i32, i32) {
    %c0_i32 = arith.constant 0 : i32
    %c0_i32_0 = arith.constant 0 : i32
    %c0_i32_1 = arith.constant 0 : i32
    return %arg0, %c0_i32, %c0_i32_0 : i32, i32, i32
  }
  func.func @transform_3(%arg0: i32) -> (i32, i32, i32) {
    %c0_i32 = arith.constant 0 : i32
    %c0_i32_0 = arith.constant 0 : i32
    %c0_i32_1 = arith.constant 0 : i32
    return %arg0, %c0_i32, %c0_i32_0 : i32, i32, i32
  }
  func.func @transform_4(%arg0: i32) -> (i32, i32) {
    %c0_i32 = arith.constant 0 : i32
    %c0_i32_0 = arith.constant 0 : i32
    %c0_i32_1 = arith.constant 0 : i32
    return %c0_i32, %c0_i32_0 : i32, i32
  }
  func.func @transform_5(%arg0: i32) -> (i32, i32) {
    %c0_i32 = arith.constant 0 : i32
    %c0_i32_0 = arith.constant 0 : i32
    %c0_i32_1 = arith.constant 0 : i32
    return %c0_i32, %c0_i32_0 : i32, i32
  }
  func.func @transform_6(%arg0: i32) -> (i32, i32) {
    %c0_i32 = arith.constant 0 : i32
    %c0_i32_0 = arith.constant 0 : i32
    %c0_i32_1 = arith.constant 0 : i32
    return %c0_i32, %c0_i32_0 : i32, i32
  }
  func.func @transform_7(%arg0: i32) -> (i32, i32) {
    %c0_i32 = arith.constant 0 : i32
    %c0_i32_0 = arith.constant 0 : i32
    %c0_i32_1 = arith.constant 0 : i32
    return %c0_i32, %c0_i32_0 : i32, i32
  }
  func.func @transform_8(%arg0: i32) -> (i32, i32) {
    %c0_i32 = arith.constant 0 : i32
    %c0_i32_0 = arith.constant 0 : i32
    %c0_i32_1 = arith.constant 0 : i32
    return %c0_i32, %c0_i32_0 : i32, i32
  }
  func.func @transform_9(%arg0: i32) -> (i32, i32, i32) {
    %c0_i32 = arith.constant 0 : i32
    %c0_i32_0 = arith.constant 0 : i32
    %c0_i32_1 = arith.constant 0 : i32
    return %arg0, %c0_i32, %c0_i32_0 : i32, i32, i32
  }
}

</mosaic_0001>

<llo_original>
// kernel: multi_head_gat.1
$region0: #{multi_head_gat.1}
  #allocation0 [shape = 'u32[]', space=smem, size = 0x4, offset = 0x4, fixed_abs, tag = 'smem constant byte address 0x4 - core index']
  #allocation1 [shape = 'u32[144,128]{1,0:T(1,128)}', space=vmem, size = 0x12000, scoped, tag = 'internal scratch']
  %s0 = inlined_call_operand.vmem [shape: f32[2,32,8], index: 0, kind: input, shape index: {}]
  %s1 = inlined_call_operand.vmem [shape: f32[2,32,8], index: 1, kind: input, shape index: {}]
  %s2 = inlined_call_operand.vmem [shape: f32[2,32,128], index: 2, kind: input, shape index: {}]
  %s3 = inlined_call_operand.vmem [shape: s32[2,1,32], index: 3, kind: input, shape index: {}]
  %s4 = inlined_call_operand.vmem [shape: f32[8,8], index: 4, kind: input, shape index: {}]
  %s5 = inlined_call_operand.vmem [shape: f32[8,2], index: 5, kind: input, shape index: {}]
  %s6 = inlined_call_operand.vmem [shape: f32[8,2], index: 6, kind: input, shape index: {}]
  %s7 = inlined_call_operand.vmem [shape: f32[128,2], index: 7, kind: input, shape index: {}]
  %s8 = inlined_call_operand.vmem [shape: f32[1,2], index: 8, kind: input, shape index: {}]
  %s9 = inlined_call_operand.vmem [shape: f32[2,16,8], index: 9, kind: output, shape index: {}]
  %s10 = sld [smem:[#allocation0]]
  $region69: #{multi_head_gat.1} parent=0
    _
  %s12 = ssub.s32 1, %s10
  %s13 = scalar_select 0, %s12, %s10
  loop: start=0, step=1, limit=4
  $region2: #{multi_head_gat.1} parent=0 // loop_pre_header
    _
  $region3: #{multi_head_gat.1} parent=0 // loop_header
    %s15 = sphi 0, %s19
    %p16 = scmp.ge.s32.totalorder %s15, 4
    %s25 = sphi 0, %s27
    %s28 = sphi 0, %s25
    %s29 = sphi 0, %s28
    %s45 = sphi 0, %s29
    %s51 = sphi 0, %s53
    %s54 = sphi 0, %s51
    %s55 = sphi 0, %s54
    %s71 = sphi 0, %s55
    %s77 = sphi 0, %s79
    %s80 = sphi 0, %s77
    %s81 = sphi 0, %s80
    %s97 = sphi 0, %s81
    %s103 = sphi 0, %s105
    %s106 = sphi 0, %s103
    %s107 = sphi 0, %s106
    %s123 = sphi 0, %s107
    %s127 = sphi 0, %s127
    %s129 = sphi 0, %s127
    %s130 = sphi 0, %s129
    %s144 = sphi 0, %s130
    %s148 = sphi 0, %s148
    %s150 = sphi 0, %s148
    %s151 = sphi 0, %s150
    %s165 = sphi 0, %s151
    %s169 = sphi 0, %s169
    %s171 = sphi 0, %s169
    %s172 = sphi 0, %s171
    %s186 = sphi 0, %s172
    %s190 = sphi 0, %s190
    %s192 = sphi 0, %s190
    %s193 = sphi 0, %s192
    %s207 = sphi 0, %s193
    %s211 = sphi 0, %s211
    %s213 = sphi 0, %s211
    %s214 = sphi 0, %s213
    %s228 = sphi 0, %s214
    %s234 = sphi 0, %s236
    %s237 = sphi 0, %s234
    %s238 = sphi 0, %s237
    %s254 = sphi 0, %s238
  $region4: #{multi_head_gat.1} parent=0 // loop_header_branch
    %18 = sbr.rel (%p16) target = $region8
  $region5: #{multi_head_gat.1} parent=0 // loop_body
    %s20 = ssub.s32 %s15, 1
    %s21 = ssub.s32 %s15, 2
    %s22 = sadd.s32 %s15, 1
    %s23 = ssub.s32 %s15, %s22
    %p24 = scmp.eq.s32.totalorder %s23, 0
    %s26 = sadd.s32 %s25, 1
    %s27 = scalar_select %p24, %s25, %s26
    %p30 = pneg %p24
    %p31 = scmp.eq.s32.totalorder %s15, 1
    %p32 = por %p30, %p31
    %p33 = scmp.ne.s32.totalorder %s25, %s28
    %p34 = scmp.eq.s32.totalorder %s15, 0
    %p35 = por %p33, %p34
    %p36 = scmp.ne.s32.totalorder %s25, %s28
    %p37 = scmp.eq.s32.totalorder %s20, 1
    %p38 = por %p36, %p37
    %p39 = scmp.ne.s32.totalorder %s28, %s29
    %p40 = scmp.eq.s32.totalorder %s20, 0
    %p41 = por %p39, %p40
    %p42 = scmp.ne.s32.totalorder %s28, %s29
    %p43 = scmp.eq.s32.totalorder %s21, 1
    %p44 = por %p42, %p43
    %p46 = scmp.ne.s32.totalorder %s29, %s45
    %p47 = scmp.eq.s32.totalorder %s21, 0
    %p48 = por %p46, %p47
    %s49 = ssub.s32 %s15, %s22
    %p50 = scmp.eq.s32.totalorder %s49, 0
    %s52 = sadd.s32 %s51, 1
    %s53 = scalar_select %p50, %s51, %s52
    %p56 = pneg %p50
    %p57 = scmp.eq.s32.totalorder %s15, 1
    %p58 = por %p56, %p57
    %p59 = scmp.ne.s32.totalorder %s51, %s54
    %p60 = scmp.eq.s32.totalorder %s15, 0
    %p61 = por %p59, %p60
    %p62 = scmp.ne.s32.totalorder %s51, %s54
    %p63 = scmp.eq.s32.totalorder %s20, 1
    %p64 = por %p62, %p63
    %p65 = scmp.ne.s32.totalorder %s54, %s55
    %p66 = scmp.eq.s32.totalorder %s20, 0
    %p67 = por %p65, %p66
    %p68 = scmp.ne.s32.totalorder %s54, %s55
    %p69 = scmp.eq.s32.totalorder %s21, 1
    %p70 = por %p68, %p69
    %p72 = scmp.ne.s32.totalorder %s55, %s71
    %p73 = scmp.eq.s32.totalorder %s21, 0
    %p74 = por %p72, %p73
    %s75 = ssub.s32 %s15, %s22
    %p76 = scmp.eq.s32.totalorder %s75, 0
    %s78 = sadd.s32 %s77, 1
    %s79 = scalar_select %p76, %s77, %s78
    %p82 = pneg %p76
    %p83 = scmp.eq.s32.totalorder %s15, 1
    %p84 = por %p82, %p83
    %p85 = scmp.ne.s32.totalorder %s77, %s80
    %p86 = scmp.eq.s32.totalorder %s15, 0
    %p87 = por %p85, %p86
    %p88 = scmp.ne.s32.totalorder %s77, %s80
    %p89 = scmp.eq.s32.totalorder %s20, 1
    %p90 = por %p88, %p89
    %p91 = scmp.ne.s32.totalorder %s80, %s81
    %p92 = scmp.eq.s32.totalorder %s20, 0
    %p93 = por %p91, %p92
    %p94 = scmp.ne.s32.totalorder %s80, %s81
    %p95 = scmp.eq.s32.totalorder %s21, 1
    %p96 = por %p94, %p95
    %p98 = scmp.ne.s32.totalorder %s81, %s97
    %p99 = scmp.eq.s32.totalorder %s21, 0
    %p100 = por %p98, %p99
    %s101 = ssub.s32 %s15, %s22
    %p102 = scmp.eq.s32.totalorder %s101, 0
    %s104 = sadd.s32 %s103, 1
    %s105 = scalar_select %p102, %s103, %s104
    %p108 = pneg %p102
    %p109 = scmp.eq.s32.totalorder %s15, 1
    %p110 = por %p108, %p109
    %p111 = scmp.ne.s32.totalorder %s103, %s106
    %p112 = scmp.eq.s32.totalorder %s15, 0
    %p113 = por %p111, %p112
    %p114 = scmp.ne.s32.totalorder %s103, %s106
    %p115 = scmp.eq.s32.totalorder %s20, 1
    %p116 = por %p114, %p115
    %p117 = scmp.ne.s32.totalorder %s106, %s107
    %p118 = scmp.eq.s32.totalorder %s20, 0
    %p119 = por %p117, %p118
    %p120 = scmp.ne.s32.totalorder %s106, %s107
    %p121 = scmp.eq.s32.totalorder %s21, 1
    %p122 = por %p120, %p121
    %p124 = scmp.ne.s32.totalorder %s107, %s123
    %p125 = scmp.eq.s32.totalorder %s21, 0
    %p126 = por %p124, %p125
    %s128 = sadd.s32 %s127, 1
    %p131 = scmp.eq.s32.totalorder %s15, 1
    %p132 = scmp.ne.s32.totalorder %s127, %s129
    %p133 = scmp.eq.s32.totalorder %s15, 0
    %p134 = por %p132, %p133
    %p135 = scmp.ne.s32.totalorder %s127, %s129
    %p136 = scmp.eq.s32.totalorder %s20, 1
    %p137 = por %p135, %p136
    %p138 = scmp.ne.s32.totalorder %s129, %s130
    %p139 = scmp.eq.s32.totalorder %s20, 0
    %p140 = por %p138, %p139
    %p141 = scmp.ne.s32.totalorder %s129, %s130
    %p142 = scmp.eq.s32.totalorder %s21, 1
    %p143 = por %p141, %p142
    %p145 = scmp.ne.s32.totalorder %s130, %s144
    %p146 = scmp.eq.s32.totalorder %s21, 0
    %p147 = por %p145, %p146
    %s149 = sadd.s32 %s148, 1
    %p152 = scmp.eq.s32.totalorder %s15, 1
    %p153 = scmp.ne.s32.totalorder %s148, %s150
    %p154 = scmp.eq.s32.totalorder %s15, 0
    %p155 = por %p153, %p154
    %p156 = scmp.ne.s32.totalorder %s148, %s150
    %p157 = scmp.eq.s32.totalorder %s20, 1
    %p158 = por %p156, %p157
    %p159 = scmp.ne.s32.totalorder %s150, %s151
    %p160 = scmp.eq.s32.totalorder %s20, 0
    %p161 = por %p159, %p160
    %p162 = scmp.ne.s32.totalorder %s150, %s151
    %p163 = scmp.eq.s32.totalorder %s21, 1
    %p164 = por %p162, %p163
    %p166 = scmp.ne.s32.totalorder %s151, %s165
    %p167 = scmp.eq.s32.totalorder %s21, 0
    %p168 = por %p166, %p167
    %s170 = sadd.s32 %s169, 1
    %p173 = scmp.eq.s32.totalorder %s15, 1
    %p174 = scmp.ne.s32.totalorder %s169, %s171
    %p175 = scmp.eq.s32.totalorder %s15, 0
    %p176 = por %p174, %p175
    %p177 = scmp.ne.s32.totalorder %s169, %s171
    %p178 = scmp.eq.s32.totalorder %s20, 1
    %p179 = por %p177, %p178
    %p180 = scmp.ne.s32.totalorder %s171, %s172
    %p181 = scmp.eq.s32.totalorder %s20, 0
    %p182 = por %p180, %p181
    %p183 = scmp.ne.s32.totalorder %s171, %s172
    %p184 = scmp.eq.s32.totalorder %s21, 1
    %p185 = por %p183, %p184
    %p187 = scmp.ne.s32.totalorder %s172, %s186
    %p188 = scmp.eq.s32.totalorder %s21, 0
    %p189 = por %p187, %p188
    %s191 = sadd.s32 %s190, 1
    %p194 = scmp.eq.s32.totalorder %s15, 1
    %p195 = scmp.ne.s32.totalorder %s190, %s192
    %p196 = scmp.eq.s32.totalorder %s15, 0
    %p197 = por %p195, %p196
    %p198 = scmp.ne.s32.totalorder %s190, %s192
    %p199 = scmp.eq.s32.totalorder %s20, 1
    %p200 = por %p198, %p199
    %p201 = scmp.ne.s32.totalorder %s192, %s193
    %p202 = scmp.eq.s32.totalorder %s20, 0
    %p203 = por %p201, %p202
    %p204 = scmp.ne.s32.totalorder %s192, %s193
    %p205 = scmp.eq.s32.totalorder %s21, 1
    %p206 = por %p204, %p205
    %p208 = scmp.ne.s32.totalorder %s193, %s207
    %p209 = scmp.eq.s32.totalorder %s21, 0
    %p210 = por %p208, %p209
    %s212 = sadd.s32 %s211, 1
    %p215 = scmp.eq.s32.totalorder %s15, 1
    %p216 = scmp.ne.s32.totalorder %s211, %s213
    %p217 = scmp.eq.s32.totalorder %s15, 0
    %p218 = por %p216, %p217
    %p219 = scmp.ne.s32.totalorder %s211, %s213
    %p220 = scmp.eq.s32.totalorder %s20, 1
    %p221 = por %p219, %p220
    %p222 = scmp.ne.s32.totalorder %s213, %s214
    %p223 = scmp.eq.s32.totalorder %s20, 0
    %p224 = por %p222, %p223
    %p225 = scmp.ne.s32.totalorder %s213, %s214
    %p226 = scmp.eq.s32.totalorder %s21, 1
    %p227 = por %p225, %p226
    %p229 = scmp.ne.s32.totalorder %s214, %s228
    %p230 = scmp.eq.s32.totalorder %s21, 0
    %p231 = por %p229, %p230
    %s232 = ssub.s32 %s15, %s22
    %p233 = scmp.eq.s32.totalorder %s232, 0
    %s235 = sadd.s32 %s234, 1
    %s236 = scalar_select %p233, %s234, %s235
    %p239 = pneg %p233
    %p240 = scmp.eq.s32.totalorder %s15, 1
    %p241 = por %p239, %p240
    %p242 = scmp.ne.s32.totalorder %s234, %s237
    %p243 = scmp.eq.s32.totalorder %s15, 0
    %p244 = por %p242, %p243
    %p245 = scmp.ne.s32.totalorder %s234, %s237
    %p246 = scmp.eq.s32.totalorder %s20, 1
    %p247 = por %p245, %p246
    %p248 = scmp.ne.s32.totalorder %s237, %s238
    %p249 = scmp.eq.s32.totalorder %s20, 0
    %p250 = por %p248, %p249
    %p251 = scmp.ne.s32.totalorder %s237, %s238
    %p252 = scmp.eq.s32.totalorder %s21, 1
    %p253 = por %p251, %p252
    %p255 = scmp.ne.s32.totalorder %s238, %s254
    %p256 = scmp.eq.s32.totalorder %s21, 0
    %p257 = por %p255, %p256
    %p258 = scmp.le.s32.totalorder 1, %s15
    %p259 = scmp.lt.s32.totalorder %s15, 3
    %p260 = pnand %p258, %p259
    %p261 = pneg %p260
    // Predicated region
    $region9: #{multi_head_gat.1} parent=5 // pred_check
      _
    $region10: #{multi_head_gat.1} parent=5 // pred_check_branch
      %263 = sbr.rel (%p260) target = $region12
    $region11: #{multi_head_gat.1} parent=5 // pred_region
      %s264 = ssub.s32 %s15, 1
      // Predicated region
      $region13: #{multi_head_gat.1} parent=11 // pred_check
        %p265 = pneg %p140
      $region14: #{multi_head_gat.1} parent=11 // pred_check_branch
        %267 = sbr.rel (%p265) target = $region16
      $region15: #{multi_head_gat.1} parent=11 // pred_region
        _
      $region16: #{multi_head_gat.1} parent=11 // pred_fallthru
        _
      // Predicated region
      $region17: #{multi_head_gat.1} parent=11 // pred_check
        %p268 = pneg %p161
      $region18: #{multi_head_gat.1} parent=11 // pred_check_branch
        %270 = sbr.rel (%p268) target = $region20
      $region19: #{multi_head_gat.1} parent=11 // pred_region
        _
      $region20: #{multi_head_gat.1} parent=11 // pred_fallthru
        _
      // Predicated region
      $region21: #{multi_head_gat.1} parent=11 // pred_check
        %p271 = pneg %p182
      $region22: #{multi_head_gat.1} parent=11 // pred_check_branch
        %273 = sbr.rel (%p271) target = $region24
      $region23: #{multi_head_gat.1} parent=11 // pred_region
        _
      $region24: #{multi_head_gat.1} parent=11 // pred_fallthru
        _
      // Predicated region
      $region25: #{multi_head_gat.1} parent=11 // pred_check
        %p274 = pneg %p203
      $region26: #{multi_head_gat.1} parent=11 // pred_check_branch
        %276 = sbr.rel (%p274) target = $region28
      $region27: #{multi_head_gat.1} parent=11 // pred_region
        _
      $region28: #{multi_head_gat.1} parent=11 // pred_fallthru
        _
      // Predicated region
      $region29: #{multi_head_gat.1} parent=11 // pred_check
        %p277 = pneg %p224
      $region30: #{multi_head_gat.1} parent=11 // pred_check_branch
        %279 = sbr.rel (%p277) target = $region32
      $region31: #{multi_head_gat.1} parent=11 // pred_region
        _
      $region32: #{multi_head_gat.1} parent=11 // pred_fallthru
        _
    $region12: #{multi_head_gat.1} parent=5 // pred_fallthru
      _
    %p280 = scmp.lt.s32.totalorder %s15, 2
    // Predicated region
    $region33: #{multi_head_gat.1} parent=5 // pred_check
      %p281 = pneg %p280
    $region34: #{multi_head_gat.1} parent=5 // pred_check_branch
      %283 = sbr.rel (%p281) target = $region36
    $region35: #{multi_head_gat.1} parent=5 // pred_region
      // Predicated region
      $region37: #{multi_head_gat.1} parent=35 // pred_check
        %p284 = pneg %p35
      $region38: #{multi_head_gat.1} parent=35 // pred_check_branch
        %286 = sbr.rel (%p284) target = $region40
      $region39: #{multi_head_gat.1} parent=35 // pred_region
        %p287 = scmp.lt.s32.totalorder %s15, 1
        %s288 = scalar_select %p287, %s15, 1
        %s289 = smul.addr %s288, 4
        %s290 = smul.addr %s289, 8
        %s291 = scalar_lea.vmem %s0, %s290
      $region40: #{multi_head_gat.1} parent=35 // pred_fallthru
        _
      // Predicated region
      $region41: #{multi_head_gat.1} parent=35 // pred_check
        %p292 = pneg %p61
      $region42: #{multi_head_gat.1} parent=35 // pred_check_branch
        %294 = sbr.rel (%p292) target = $region44
      $region43: #{multi_head_gat.1} parent=35 // pred_region
        %p295 = scmp.lt.s32.totalorder %s15, 1
        %s296 = scalar_select %p295, %s15, 1
        %s297 = smul.addr %s296, 4
        %s298 = smul.addr %s297, 8
        %s299 = scalar_lea.vmem %s1, %s298
      $region44: #{multi_head_gat.1} parent=35 // pred_fallthru
        _
      // Predicated region
      $region45: #{multi_head_gat.1} parent=35 // pred_check
        %p300 = pneg %p87
      $region46: #{multi_head_gat.1} parent=35 // pred_check_branch
        %302 = sbr.rel (%p300) target = $region48
      $region47: #{multi_head_gat.1} parent=35 // pred_region
        %p303 = scmp.lt.s32.totalorder %s15, 1
        %s304 = scalar_select %p303, %s15, 1
        %s305 = smul.addr %s304, 4
        %s306 = smul.addr %s305, 8
        %s307 = scalar_lea.vmem %s2, %s306
      $region48: #{multi_head_gat.1} parent=35 // pred_fallthru
        _
      // Predicated region
      $region49: #{multi_head_gat.1} parent=35 // pred_check
        %p308 = pneg %p113
      $region50: #{multi_head_gat.1} parent=35 // pred_check_branch
        %310 = sbr.rel (%p308) target = $region52
      $region51: #{multi_head_gat.1} parent=35 // pred_region
        %p311 = scmp.lt.s32.totalorder %s15, 1
        %s312 = scalar_select %p311, %s15, 1
        %s313 = scalar_lea.vmem %s3, %s312
      $region52: #{multi_head_gat.1} parent=35 // pred_fallthru
        _
    $region36: #{multi_head_gat.1} parent=5 // pred_fallthru
      _
    %p314 = scmp.le.s32.totalorder 1, %s15
    %p315 = scmp.lt.s32.totalorder %s15, 3
    %p316 = pnand %p314, %p315
    %p317 = pneg %p316
    // Predicated region
    $region53: #{multi_head_gat.1} parent=5 // pred_check
      _
    $region54: #{multi_head_gat.1} parent=5 // pred_check_branch
      %319 = sbr.rel (%p316) target = $region56
    $region55: #{multi_head_gat.1} parent=5 // pred_region
      %s320 = ssub.s32 %s15, 1
      %p321 = scmp.lt.s32.totalorder %s20, 1
      %s322 = scalar_select %p321, %s20, 1
      %s323 = smul.addr %s322, 4
      %s324 = smul.addr %s323, 8
      %s325 = scalar_lea.vmem %s0, %s324
      %p326 = pneg %p41
      %p327 = pneg %p38
      %p328 = scmp.lt.s32.totalorder %s20, 1
      %s329 = scalar_select %p328, %s20, 1
      %s330 = smul.addr %s329, 4
      %s331 = smul.addr %s330, 8
      %s332 = scalar_lea.vmem %s1, %s331
      %p333 = pneg %p67
      %p334 = pneg %p64
      %p335 = scmp.lt.s32.totalorder %s20, 1
      %s336 = scalar_select %p335, %s20, 1
      %s337 = smul.addr %s336, 4
      %s338 = smul.addr %s337, 8
      %s339 = scalar_lea.vmem %s2, %s338
      %p340 = pneg %p93
      %p341 = pneg %p90
      %p342 = scmp.lt.s32.totalorder %s20, 1
      %s343 = scalar_select %p342, %s20, 1
      %s344 = scalar_lea.vmem %s3, %s343
      %p345 = pneg %p119
      %p346 = pneg %p116
      %p347 = pneg %p140
      %p348 = pneg %p137
      %p349 = pneg %p161
      %p350 = pneg %p158
      %p351 = pneg %p182
      %p352 = pneg %p179
      %p353 = pneg %p203
      %p354 = pneg %p200
      %p355 = pneg %p224
      %p356 = pneg %p221
      %p357 = pneg %p250
      %p358 = pneg %p247
      %p359 = scmp.lt.s32.totalorder %s20, 1
      %s360 = scalar_select %p359, %s20, 1
      %s361 = smul.addr %s360, 2
      %s362 = smul.addr %s361, 8
      %s363 = scalar_lea.vmem %s9, %s362
      %p364 = scmp.lt.s32.totalorder %s20, 1
      %s365 = scalar_select %p364, %s20, 1
      %s366 = smul.addr %s365, 4
      %s367 = smul.addr %s366, 8
      %s368 = scalar_lea.vmem %s0, %s367
      %p369 = scmp.lt.s32.totalorder %s20, 1
      %s370 = scalar_select %p369, %s20, 1
      %s371 = smul.addr %s370, 4
      %s372 = smul.addr %s371, 8
      %s373 = scalar_lea.vmem %s1, %s372
      %p374 = scmp.lt.s32.totalorder %s20, 1
      %s375 = scalar_select %p374, %s20, 1
      %s376 = smul.addr %s375, 4
      %s377 = smul.addr %s376, 8
      %s378 = scalar_lea.vmem %s2, %s377
      %p379 = scmp.lt.s32.totalorder %s20, 1
      %s380 = scalar_select %p379, %s20, 1
      %s381 = scalar_lea.vmem %s3, %s380
      %p382 = scmp.lt.s32.totalorder %s20, 1
      %s383 = scalar_select %p382, %s20, 1
      %s384 = smul.addr %s383, 2
      %s385 = smul.addr %s384, 8
      %s386 = scalar_lea.vmem %s9, %s385
      %v387 = vld [vmem:[%s368] sm:$0xff]
      %v388 = vld [vmem:[%s368 + $0x8] sm:$0xff]
      %v389 = vld [vmem:[%s368 + $0x10] sm:$0xff]
      %v390 = vld [vmem:[%s368 + $0x18] sm:$0xff]
      %v391 = vld [vmem:[%s373] sm:$0xff]
      %v392 = vld [vmem:[%s373 + $0x8] sm:$0xff]
      %v393 = vld [vmem:[%s373 + $0x10] sm:$0xff]
      %v394 = vld [vmem:[%s373 + $0x18] sm:$0xff]
      %v395 = vld [vmem:[%s378] sm:$0xff]
      %v396 = vld [vmem:[%s378 + $0x8] sm:$0xff]
      %v397 = vld [vmem:[%s378 + $0x10] sm:$0xff]
      %v398 = vld [vmem:[%s378 + $0x18] sm:$0xff]
      %v399 = vld [vmem:[%s4] sm:$0xff]
      %vm400 = vcmask 64512
      %v402 = vsel %vm400, %v387, 0
      %v405 = vsel %vm400, %v388, 0
      %v408 = vsel %vm400, %v389, 0
      %v411 = vsel %vm400, %v390, 0
      %413 = vmatprep.subr.mxu0 0.0
      %414 = vmatpush1.msra.mxu0 %v399
      %415 = vmatprep.subr.mxu0 0.0
      %416 = vmatpush1.msra.mxu0 0.0
      %417 = vmatprep.subr.mxu0 0.0
      %418 = vmatpush1.msra.mxu0 0.0
      %419 = vmatprep.subr.mxu0 0.0
      %420 = vmatpush1.msra.mxu0 0.0
      %421 = vmatprep.subr.mxu0 0.0
      %422 = vmatpush1.msra.mxu0 0.0
      %423 = vmatprep.subr.mxu0 0.0
      %424 = vmatpush1.msra.mxu0 0.0
      %425 = vmatprep.subr.mxu0 0.0
      %426 = vmatpush1.msra.mxu0 0.0
      %427 = vmatprep.subr.mxu0 0.0
      %428 = vmatpush1.msra.mxu0 0.0
      %429 = vmatprep.subr.mxu0 0.0
      %430 = vmatpush1.msra.mxu0 0.0
      %431 = vmatprep.subr.mxu0 0.0
      %432 = vmatpush1.msra.mxu0 0.0
      %433 = vmatprep.subr.mxu0 0.0
      %434 = vmatpush1.msra.mxu0 0.0
      %435 = vmatprep.subr.mxu0 0.0
      %436 = vmatpush1.msra.mxu0 0.0
      %437 = vmatprep.subr.mxu0 0.0
      %438 = vmatpush1.msra.mxu0 0.0
      %439 = vmatprep.subr.mxu0 0.0
      %440 = vmatpush1.msra.mxu0 0.0
      %441 = vmatprep.subr.mxu0 0.0
      %442 = vmatpush1.msra.mxu0 0.0
      %443 = vmatprep.subr.mxu0 0.0
      %444 = vmatpush1.msra.mxu0 0.0
      %445 = vmatprep.subr.mxu0 0.0
      %446 = vmatpush1.msra.mxu0 0.0
      %447 = vmatprep.subr.mxu0 0.0
      %448 = vmatpush1.msra.mxu0 0.0
      %449 = vmatprep.subr.mxu0 0.0
      %450 = vmatpush1.msra.mxu0 0.0
      %451 = vmatprep.subr.mxu0 0.0
      %452 = vmatpush1.msra.mxu0 0.0
      %453 = vmatprep.subr.mxu0 0.0
      %454 = vmatpush1.msra.mxu0 0.0
      %455 = vmatprep.subr.mxu0 0.0
      %456 = vmatpush1.msra.mxu0 0.0
      %457 = vmatprep.subr.mxu0 0.0
      %458 = vmatpush1.msra.mxu0 0.0
      %459 = vmatprep.subr.mxu0 0.0
      %460 = vmatpush1.msra.mxu0 0.0
      %461 = vmatprep.subr.mxu0 0.0
      %462 = vmatpush1.msra.mxu0 0.0
      %463 = vmatprep.subr.mxu0 0.0
      %464 = vmatpush1.msra.mxu0 0.0
      %465 = vmatprep.subr.mxu0 0.0
      %466 = vmatpush1.msra.mxu0 0.0
      %467 = vmatprep.subr.mxu0 0.0
      %468 = vmatpush1.msra.mxu0 0.0
      %469 = vmatprep.subr.mxu0 0.0
      %470 = vmatpush1.msra.mxu0 0.0
      %471 = vmatprep.subr.mxu0 0.0
      %472 = vmatpush1.msra.mxu0 0.0
      %473 = vmatprep.subr.mxu0 0.0
      %474 = vmatpush1.msra.mxu0 0.0
      %475 = vmatprep.subr.mxu0 0.0
      %476 = vmatpush1.msra.mxu0 0.0
      %477 = vmatprep.mubr.f32.mxu0 0.0
      %478 = vmatmul.mubr.f32.gmra.mrb[0].mxu0 %v402
      %v479 = vpop.f32.mrb[0].mxu0
      %v480 = vadd.f32 0.0, %v479
      %v481 = vpop.f32.mrb[0].mxu0
      %482 = vmatprep.mubr.f32.mxu0 0.0
      %483 = vmatmul.mubr.f32.gmra.mrb[0].mxu0 %v405
      %v484 = vpop.f32.mrb[0].mxu0
      %v485 = vadd.f32 0.0, %v484
      %v486 = vpop.f32.mrb[0].mxu0
      %487 = vmatprep.mubr.f32.mxu0 0.0
      %488 = vmatmul.mubr.f32.gmra.mrb[0].mxu0 %v408
      %v489 = vpop.f32.mrb[0].mxu0
      %v490 = vadd.f32 0.0, %v489
      %v491 = vpop.f32.mrb[0].mxu0
      %492 = vmatprep.mubr.f32.mxu0 0.0
      %493 = vmatmul.mubr.f32.gmra.mrb[0].mxu0 %v411
      %v494 = vpop.f32.mrb[0].mxu0
      %v495 = vadd.f32 0.0, %v494
      %v496 = vpop.f32.mrb[0].mxu0
      %497 = vdwg.mxu0
      %v498 = vld [vmem:[%s5] sm:$0xff]
      %v499 = vld [vmem:[%s6] sm:$0xff]
      %v501 = vsel %vm400, %v391, 0
      %v504 = vsel %vm400, %v392, 0
      %v507 = vsel %vm400, %v393, 0
      %v510 = vsel %vm400, %v394, 0
      %512 = vmatprep.subr.mxu0 0.0
      %513 = vmatpush1.msra.mxu0 %v499
      %514 = vmatprep.subr.mxu0 0.0
      %515 = vmatpush1.msra.mxu0 0.0
      %516 = vmatprep.subr.mxu0 0.0
      %517 = vmatpush1.msra.mxu0 0.0
      %518 = vmatprep.subr.mxu0 0.0
      %519 = vmatpush1.msra.mxu0 0.0
      %520 = vmatprep.subr.mxu0 0.0
      %521 = vmatpush1.msra.mxu0 0.0
      %522 = vmatprep.subr.mxu0 0.0
      %523 = vmatpush1.msra.mxu0 0.0
      %524 = vmatprep.subr.mxu0 0.0
      %525 = vmatpush1.msra.mxu0 0.0
      %526 = vmatprep.subr.mxu0 0.0
      %527 = vmatpush1.msra.mxu0 0.0
      %528 = vmatprep.subr.mxu0 0.0
      %529 = vmatpush1.msra.mxu0 0.0
      %530 = vmatprep.subr.mxu0 0.0
      %531 = vmatpush1.msra.mxu0 0.0
      %532 = vmatprep.subr.mxu0 0.0
      %533 = vmatpush1.msra.mxu0 0.0
      %534 = vmatprep.subr.mxu0 0.0
      %535 = vmatpush1.msra.mxu0 0.0
      %536 = vmatprep.subr.mxu0 0.0
      %537 = vmatpush1.msra.mxu0 0.0
      %538 = vmatprep.subr.mxu0 0.0
      %539 = vmatpush1.msra.mxu0 0.0
      %540 = vmatprep.subr.mxu0 0.0
      %541 = vmatpush1.msra.mxu0 0.0
      %542 = vmatprep.subr.mxu0 0.0
      %543 = vmatpush1.msra.mxu0 0.0
      %544 = vmatprep.subr.mxu0 0.0
      %545 = vmatpush1.msra.mxu0 0.0
      %546 = vmatprep.subr.mxu0 0.0
      %547 = vmatpush1.msra.mxu0 0.0
      %548 = vmatprep.subr.mxu0 0.0
      %549 = vmatpush1.msra.mxu0 0.0
      %550 = vmatprep.subr.mxu0 0.0
      %551 = vmatpush1.msra.mxu0 0.0
      %552 = vmatprep.subr.mxu0 0.0
      %553 = vmatpush1.msra.mxu0 0.0
      %554 = vmatprep.subr.mxu0 0.0
      %555 = vmatpush1.msra.mxu0 0.0
      %556 = vmatprep.subr.mxu0 0.0
      %557 = vmatpush1.msra.mxu0 0.0
      %558 = vmatprep.subr.mxu0 0.0
      %559 = vmatpush1.msra.mxu0 0.0
      %560 = vmatprep.subr.mxu0 0.0
      %561 = vmatpush1.msra.mxu0 0.0
      %562 = vmatprep.subr.mxu0 0.0
      %563 = vmatpush1.msra.mxu0 0.0
      %564 = vmatprep.subr.mxu0 0.0
      %565 = vmatpush1.msra.mxu0 0.0
      %566 = vmatprep.subr.mxu0 0.0
      %567 = vmatpush1.msra.mxu0 0.0
      %568 = vmatprep.subr.mxu0 0.0
      %569 = vmatpush1.msra.mxu0 0.0
      %570 = vmatprep.subr.mxu0 0.0
      %571 = vmatpush1.msra.mxu0 0.0
      %572 = vmatprep.subr.mxu0 0.0
      %573 = vmatpush1.msra.mxu0 0.0
      %574 = vmatprep.subr.mxu0 0.0
      %575 = vmatpush1.msra.mxu0 0.0
      %576 = vmatprep.mubr.f32.mxu0 0.0
      %577 = vmatmul.mubr.f32.gmra.mrb[0].mxu0 %v501
      %v578 = vpop.f32.mrb[0].mxu0
      %v579 = vadd.f32 0.0, %v578
      %v580 = vpop.f32.mrb[0].mxu0
      %581 = vmatprep.mubr.f32.mxu0 0.0
      %582 = vmatmul.mubr.f32.gmra.mrb[0].mxu0 %v504
      %v583 = vpop.f32.mrb[0].mxu0
      %v584 = vadd.f32 0.0, %v583
      %v585 = vpop.f32.mrb[0].mxu0
      %586 = vmatprep.mubr.f32.mxu0 0.0
      %587 = vmatmul.mubr.f32.gmra.mrb[0].mxu0 %v507
      %v588 = vpop.f32.mrb[0].mxu0
      %v589 = vadd.f32 0.0, %v588
      %v590 = vpop.f32.mrb[0].mxu0
      %591 = vmatprep.mubr.f32.mxu0 0.0
      %592 = vmatmul.mubr.f32.gmra.mrb[0].mxu0 %v510
      %v593 = vpop.f32.mrb[0].mxu0
      %v594 = vadd.f32 0.0, %v593
      %v595 = vpop.f32.mrb[0].mxu0
      %596 = vdwg.mxu0
      %597 = vmatprep.subr.mxu0 0.0
      %598 = vmatpush1.msra.mxu0 %v498
      %599 = vmatprep.subr.mxu0 0.0
      %600 = vmatpush1.msra.mxu0 0.0
      %601 = vmatprep.subr.mxu0 0.0
      %602 = vmatpush1.msra.mxu0 0.0
      %603 = vmatprep.subr.mxu0 0.0
      %604 = vmatpush1.msra.mxu0 0.0
      %605 = vmatprep.subr.mxu0 0.0
      %606 = vmatpush1.msra.mxu0 0.0
      %607 = vmatprep.subr.mxu0 0.0
      %608 = vmatpush1.msra.mxu0 0.0
      %609 = vmatprep.subr.mxu0 0.0
      %610 = vmatpush1.msra.mxu0 0.0
      %611 = vmatprep.subr.mxu0 0.0
      %612 = vmatpush1.msra.mxu0 0.0
      %613 = vmatprep.subr.mxu0 0.0
      %614 = vmatpush1.msra.mxu0 0.0
      %615 = vmatprep.subr.mxu0 0.0
      %616 = vmatpush1.msra.mxu0 0.0
      %617 = vmatprep.subr.mxu0 0.0
      %618 = vmatpush1.msra.mxu0 0.0
      %619 = vmatprep.subr.mxu0 0.0
      %620 = vmatpush1.msra.mxu0 0.0
      %621 = vmatprep.subr.mxu0 0.0
      %622 = vmatpush1.msra.mxu0 0.0
      %623 = vmatprep.subr.mxu0 0.0
      %624 = vmatpush1.msra.mxu0 0.0
      %625 = vmatprep.subr.mxu0 0.0
      %626 = vmatpush1.msra.mxu0 0.0
      %627 = vmatprep.subr.mxu0 0.0
      %628 = vmatpush1.msra.mxu0 0.0
      %629 = vmatprep.subr.mxu0 0.0
      %630 = vmatpush1.msra.mxu0 0.0
      %631 = vmatprep.subr.mxu0 0.0
      %632 = vmatpush1.msra.mxu0 0.0
      %633 = vmatprep.subr.mxu0 0.0
      %634 = vmatpush1.msra.mxu0 0.0
      %635 = vmatprep.subr.mxu0 0.0
      %636 = vmatpush1.msra.mxu0 0.0
      %637 = vmatprep.subr.mxu0 0.0
      %638 = vmatpush1.msra.mxu0 0.0
      %639 = vmatprep.subr.mxu0 0.0
      %640 = vmatpush1.msra.mxu0 0.0
      %641 = vmatprep.subr.mxu0 0.0
      %642 = vmatpush1.msra.mxu0 0.0
      %643 = vmatprep.subr.mxu0 0.0
      %644 = vmatpush1.msra.mxu0 0.0
      %645 = vmatprep.subr.mxu0 0.0
      %646 = vmatpush1.msra.mxu0 0.0
      %647 = vmatprep.subr.mxu0 0.0
      %648 = vmatpush1.msra.mxu0 0.0
      %649 = vmatprep.subr.mxu0 0.0
      %650 = vmatpush1.msra.mxu0 0.0
      %651 = vmatprep.subr.mxu0 0.0
      %652 = vmatpush1.msra.mxu0 0.0
      %653 = vmatprep.subr.mxu0 0.0
      %654 = vmatpush1.msra.mxu0 0.0
      %655 = vmatprep.subr.mxu0 0.0
      %656 = vmatpush1.msra.mxu0 0.0
      %657 = vmatprep.subr.mxu0 0.0
      %658 = vmatpush1.msra.mxu0 0.0
      %659 = vmatprep.subr.mxu0 0.0
      %660 = vmatpush1.msra.mxu0 0.0
      %661 = vmatprep.mubr.f32.mxu0 0.0
      %662 = vmatmul.mubr.f32.gmra.mrb[0].mxu0 %v402
      %v663 = vpop.f32.mrb[0].mxu0
      %v664 = vadd.f32 %v579, %v663
      %v665 = vpop.f32.mrb[0].mxu0
      %666 = vmatprep.mubr.f32.mxu0 0.0
      %667 = vmatmul.mubr.f32.gmra.mrb[0].mxu0 %v405
      %v668 = vpop.f32.mrb[0].mxu0
      %v669 = vadd.f32 %v584, %v668
      %v670 = vpop.f32.mrb[0].mxu0
      %671 = vmatprep.mubr.f32.mxu0 0.0
      %672 = vmatmul.mubr.f32.gmra.mrb[0].mxu0 %v408
      %v673 = vpop.f32.mrb[0].mxu0
      %v674 = vadd.f32 %v589, %v673
      %v675 = vpop.f32.mrb[0].mxu0
      %676 = vmatprep.mubr.f32.mxu0 0.0
      %677 = vmatmul.mubr.f32.gmra.mrb[0].mxu0 %v411
      %v678 = vpop.f32.mrb[0].mxu0
      %v679 = vadd.f32 %v594, %v678
      %v680 = vpop.f32.mrb[0].mxu0
      %681 = vdwg.mxu0
      %v682 = vld [vmem:[%s7] sm:$0xff]
      %v683 = vld [vmem:[%s7 + $0x8] sm:$0xff]
      %v684 = vld [vmem:[%s7 + $0x10] sm:$0xff]
      %v685 = vld [vmem:[%s7 + $0x18] sm:$0xff]
      %v686 = vld [vmem:[%s7 + $0x20] sm:$0xff]
      %v687 = vld [vmem:[%s7 + $0x28] sm:$0xff]
      %v688 = vld [vmem:[%s7 + $0x30] sm:$0xff]
      %v689 = vld [vmem:[%s7 + $0x38] sm:$0xff]
      %v690 = vld [vmem:[%s7 + $0x40] sm:$0xff]
      %v691 = vld [vmem:[%s7 + $0x48] sm:$0xff]
      %v692 = vld [vmem:[%s7 + $0x50] sm:$0xff]
      %v693 = vld [vmem:[%s7 + $0x58] sm:$0xff]
      %v694 = vld [vmem:[%s7 + $0x60] sm:$0xff]
      %v695 = vld [vmem:[%s7 + $0x68] sm:$0xff]
      %v696 = vld [vmem:[%s7 + $0x70] sm:$0xff]
      %v697 = vld [vmem:[%s7 + $0x78] sm:$0xff]
      %698 = vmatprep.subr.mxu0 0.0
      %699 = vmatpush1.msra.mxu0 %v682
      %700 = vmatprep.subr.mxu0 0.0
      %701 = vmatpush1.msra.mxu0 %v683
      %702 = vmatprep.subr.mxu0 0.0
      %703 = vmatpush1.msra.mxu0 %v684
      %704 = vmatprep.subr.mxu0 0.0
      %705 = vmatpush1.msra.mxu0 %v685
      %706 = vmatprep.subr.mxu0 0.0
      %707 = vmatpush1.msra.mxu0 %v686
      %708 = vmatprep.subr.mxu0 0.0
      %709 = vmatpush1.msra.mxu0 %v687
      %710 = vmatprep.subr.mxu0 0.0
      %711 = vmatpush1.msra.mxu0 %v688
      %712 = vmatprep.subr.mxu0 0.0
      %713 = vmatpush1.msra.mxu0 %v689
      %714 = vmatprep.subr.mxu0 0.0
      %715 = vmatpush1.msra.mxu0 %v690
      %716 = vmatprep.subr.mxu0 0.0
      %717 = vmatpush1.msra.mxu0 %v691
      %718 = vmatprep.subr.mxu0 0.0
      %719 = vmatpush1.msra.mxu0 %v692
      %720 = vmatprep.subr.mxu0 0.0
      %721 = vmatpush1.msra.mxu0 %v693
      %722 = vmatprep.subr.mxu0 0.0
      %723 = vmatpush1.msra.mxu0 %v694
      %724 = vmatprep.subr.mxu0 0.0
      %725 = vmatpush1.msra.mxu0 %v695
      %726 = vmatprep.subr.mxu0 0.0
      %727 = vmatpush1.msra.mxu0 %v696
      %728 = vmatprep.subr.mxu0 0.0
      %729 = vmatpush1.msra.mxu0 %v697
      %730 = vmatprep.subr.mxu0 0.0
      %731 = vmatpush1.msra.mxu0 0.0
      %732 = vmatprep.subr.mxu0 0.0
      %733 = vmatpush1.msra.mxu0 0.0
      %734 = vmatprep.subr.mxu0 0.0
      %735 = vmatpush1.msra.mxu0 0.0
      %736 = vmatprep.subr.mxu0 0.0
      %737 = vmatpush1.msra.mxu0 0.0
      %738 = vmatprep.subr.mxu0 0.0
      %739 = vmatpush1.msra.mxu0 0.0
      %740 = vmatprep.subr.mxu0 0.0
      %741 = vmatpush1.msra.mxu0 0.0
      %742 = vmatprep.subr.mxu0 0.0
      %743 = vmatpush1.msra.mxu0 0.0
      %744 = vmatprep.subr.mxu0 0.0
      %745 = vmatpush1.msra.mxu0 0.0
      %746 = vmatprep.subr.mxu0 0.0
      %747 = vmatpush1.msra.mxu0 0.0
      %748 = vmatprep.subr.mxu0 0.0
      %749 = vmatpush1.msra.mxu0 0.0
      %750 = vmatprep.subr.mxu0 0.0
      %751 = vmatpush1.msra.mxu0 0.0
      %752 = vmatprep.subr.mxu0 0.0
      %753 = vmatpush1.msra.mxu0 0.0
      %754 = vmatprep.subr.mxu0 0.0
      %755 = vmatpush1.msra.mxu0 0.0
      %756 = vmatprep.subr.mxu0 0.0
      %757 = vmatpush1.msra.mxu0 0.0
      %758 = vmatprep.subr.mxu0 0.0
      %759 = vmatpush1.msra.mxu0 0.0
      %760 = vmatprep.subr.mxu0 0.0
      %761 = vmatpush1.msra.mxu0 0.0
      %762 = vmatprep.mubr.f32.mxu0 0.0
      %763 = vmatmul.mubr.f32.gmra.mrb[0].mxu0 %v395
      %v764 = vpop.f32.mrb[0].mxu0
      %v765 = vadd.f32 0.0, %v764
      %v766 = vpop.f32.mrb[0].mxu0
      %767 = vmatprep.mubr.f32.mxu0 0.0
      %768 = vmatmul.mubr.f32.gmra.mrb[0].mxu0 %v396
      %v769 = vpop.f32.mrb[0].mxu0
      %v770 = vadd.f32 0.0, %v769
      %v771 = vpop.f32.mrb[0].mxu0
      %772 = vmatprep.mubr.f32.mxu0 0.0
      %773 = vmatmul.mubr.f32.gmra.mrb[0].mxu0 %v397
      %v774 = vpop.f32.mrb[0].mxu0
      %v775 = vadd.f32 0.0, %v774
      %v776 = vpop.f32.mrb[0].mxu0
      %777 = vmatprep.mubr.f32.mxu0 0.0
      %778 = vmatmul.mubr.f32.gmra.mrb[0].mxu0 %v398
      %v779 = vpop.f32.mrb[0].mxu0
      %v780 = vadd.f32 0.0, %v779
      %v781 = vpop.f32.mrb[0].mxu0
      %782 = vdwg.mxu0
      %v783 = vadd.f32 %v664, %v765
      %v784 = vadd.f32 %v669, %v770
      %v785 = vadd.f32 %v674, %v775
      %v786 = vadd.f32 %v679, %v780
      %v787 = vld [vmem:[%s8] sm:$0x1]
      %v789 = vlaneseq
      %v790 = vshrl.u32 %v789, 7
      %v791 = vsub.s32 0, %v790
      %v792 = vrot.slane %v787, %v791
      %v794 = vadd.f32 %v783, %v792
      %v795 = vadd.f32 %v784, %v792
      %v796 = vadd.f32 %v785, %v792
      %v797 = vadd.f32 %v786, %v792
      %vm798 = vcmp.gt.f32.partialorder %v794, 0.0
      %vm799 = vcmp.gt.f32.partialorder %v795, 0.0
      %vm800 = vcmp.gt.f32.partialorder %v796, 0.0
      %vm801 = vcmp.gt.f32.partialorder %v797, 0.0
      %v802 = vmul.f32 %v794, 0.2
      %v803 = vmul.f32 %v795, 0.2
      %v804 = vmul.f32 %v796, 0.2
      %v805 = vmul.f32 %v797, 0.2
      %v806 = vsel %vm798, %v794, %v802
      %v807 = vsel %vm799, %v795, %v803
      %v808 = vsel %vm800, %v796, %v804
      %v809 = vsel %vm801, %v797, %v805
      %vm810 = vcmask 15360
      %v811 = vsel %vm810, %v806, -inf
      %v812 = vsel %vm810, %v807, -inf
      %v813 = vsel %vm810, %v808, -inf
      %v814 = vsel %vm810, %v809, -inf
      %v815 = vmax.f32 %v811, %v812
      %v816 = vmax.f32 %v813, %v814
      %v817 = vmax.f32 %v815, %v816
      %v818 = vrot.slane %v817, 4
      %v819 = vmax.f32 %v817, %v818
      %v820 = vrot.slane %v819, 2
      %v821 = vmax.f32 %v819, %v820
      %v822 = vrot.slane %v821, 1
      %v823 = vmax.f32 %v821, %v822
      %v824 = vsub.f32 %v806, %v823
      %v825 = vsub.f32 %v807, %v823
      %v826 = vsub.f32 %v808, %v823
      %v827 = vsub.f32 %v809, %v823
      %v828 = vmul.f32 %v824, 1.442695
      %v829 = vpow.pop %v828
      %v830 = vmul.f32 %v825, 1.442695
      %v831 = vpow.pop %v830
      %v832 = vmul.f32 %v826, 1.442695
      %v833 = vpow.pop %v832
      %v834 = vmul.f32 %v827, 1.442695
      %v835 = vpow.pop %v834
      %v836 = vlaneseq
      %v837 = vand.u32 %v836, 127
      %v838 = vlaneseq
      %v839 = vshrl.u32 %v838, 7
      %v840 = vmul.u32 %v839, 4
      %vm841 = vcmp.ge.s32.totalorder %v837, %v840
      %v842 = vadd.s32 %v839, 1
      %v843 = vmul.u32 %v842, 4
      %vm844 = vcmp.lt.s32.totalorder %v837, %v843
      %vm845 = vmand %vm841, %vm844
      %v846 = vsel %vm845, 1, 0
      %v847 = vcvt.s32.f32 %v846
      %v849 = vsel %vm810, %v829, 0
      %v852 = vsel %vm810, %v831, 0
      %v855 = vsel %vm810, %v833, 0
      %v858 = vsel %vm810, %v835, 0
      %vm860 = vcmask 1041408
      %v862 = vsel %vm860, %v847, 0
      %864 = vmatprep.subr.mxu0 0.0
      %865 = vmatpush1.msra.mxu0 %v862
      %866 = vmatprep.subr.mxu0 0.0
      %867 = vmatpush1.msra.mxu0 0.0
      %868 = vmatprep.subr.mxu0 0.0
      %869 = vmatpush1.msra.mxu0 0.0
      %870 = vmatprep.subr.mxu0 0.0
      %871 = vmatpush1.msra.mxu0 0.0
      %872 = vmatprep.subr.mxu0 0.0
      %873 = vmatpush1.msra.mxu0 0.0
      %874 = vmatprep.subr.mxu0 0.0
      %875 = vmatpush1.msra.mxu0 0.0
      %876 = vmatprep.subr.mxu0 0.0
      %877 = vmatpush1.msra.mxu0 0.0
      %878 = vmatprep.subr.mxu0 0.0
      %879 = vmatpush1.msra.mxu0 0.0
      %880 = vmatprep.subr.mxu0 0.0
      %881 = vmatpush1.msra.mxu0 0.0
      %882 = vmatprep.subr.mxu0 0.0
      %883 = vmatpush1.msra.mxu0 0.0
      %884 = vmatprep.subr.mxu0 0.0
      %885 = vmatpush1.msra.mxu0 0.0
      %886 = vmatprep.subr.mxu0 0.0
      %887 = vmatpush1.msra.mxu0 0.0
      %888 = vmatprep.subr.mxu0 0.0
      %889 = vmatpush1.msra.mxu0 0.0
      %890 = vmatprep.subr.mxu0 0.0
      %891 = vmatpush1.msra.mxu0 0.0
      %892 = vmatprep.subr.mxu0 0.0
      %893 = vmatpush1.msra.mxu0 0.0
      %894 = vmatprep.subr.mxu0 0.0
      %895 = vmatpush1.msra.mxu0 0.0
      %896 = vmatprep.subr.mxu0 0.0
      %897 = vmatpush1.msra.mxu0 0.0
      %898 = vmatprep.subr.mxu0 0.0
      %899 = vmatpush1.msra.mxu0 0.0
      %900 = vmatprep.subr.mxu0 0.0
      %901 = vmatpush1.msra.mxu0 0.0
      %902 = vmatprep.subr.mxu0 0.0
      %903 = vmatpush1.msra.mxu0 0.0
      %904 = vmatprep.subr.mxu0 0.0
      %905 = vmatpush1.msra.mxu0 0.0
      %906 = vmatprep.subr.mxu0 0.0
      %907 = vmatpush1.msra.mxu0 0.0
      %908 = vmatprep.subr.mxu0 0.0
      %909 = vmatpush1.msra.mxu0 0.0
      %910 = vmatprep.subr.mxu0 0.0
      %911 = vmatpush1.msra.mxu0 0.0
      %912 = vmatprep.subr.mxu0 0.0
      %913 = vmatpush1.msra.mxu0 0.0
      %914 = vmatprep.subr.mxu0 0.0
      %915 = vmatpush1.msra.mxu0 0.0
      %916 = vmatprep.subr.mxu0 0.0
      %917 = vmatpush1.msra.mxu0 0.0
      %918 = vmatprep.subr.mxu0 0.0
      %919 = vmatpush1.msra.mxu0 0.0
      %920 = vmatprep.subr.mxu0 0.0
      %921 = vmatpush1.msra.mxu0 0.0
      %922 = vmatprep.subr.mxu0 0.0
      %923 = vmatpush1.msra.mxu0 0.0
      %924 = vmatprep.subr.mxu0 0.0
      %925 = vmatpush1.msra.mxu0 0.0
      %926 = vmatprep.subr.mxu0 0.0
      %927 = vmatpush1.msra.mxu0 0.0
      %928 = vmatprep.mubr.f32.mxu0 0.0
      %929 = vmatmul.mubr.f32.gmra.mrb[0].mxu0 %v849
      %v930 = vpop.f32.mrb[0].mxu0
      %v931 = vadd.f32 0.0, %v930
      %v932 = vpop.f32.mrb[0].mxu0
      %933 = vmatprep.mubr.f32.mxu0 0.0
      %934 = vmatmul.mubr.f32.gmra.mrb[0].mxu0 %v852
      %v935 = vpop.f32.mrb[0].mxu0
      %v936 = vadd.f32 0.0, %v935
      %v937 = vpop.f32.mrb[0].mxu0
      %938 = vmatprep.mubr.f32.mxu0 0.0
      %939 = vmatmul.mubr.f32.gmra.mrb[0].mxu0 %v855
      %v940 = vpop.f32.mrb[0].mxu0
      %v941 = vadd.f32 0.0, %v940
      %v942 = vpop.f32.mrb[0].mxu0
      %943 = vmatprep.mubr.f32.mxu0 0.0
      %944 = vmatmul.mubr.f32.gmra.mrb[0].mxu0 %v858
      %v945 = vpop.f32.mrb[0].mxu0
      %v946 = vadd.f32 0.0, %v945
      %v947 = vpop.f32.mrb[0].mxu0
      %948 = vdwg.mxu0
      %v949 = vmul.f32 %v931, %v480
      %v950 = vmul.f32 %v936, %v485
      %v951 = vmul.f32 %v941, %v490
      %v952 = vmul.f32 %v946, %v495
      %953 = vrot.lane.b32.xlu0 %v829, 8
      %v954 = vpop.permute.xlu0 %953
      %955 = vrot.lane.b32.xlu0 %v831, 8
      %v956 = vpop.permute.xlu0 %955
      %957 = vrot.lane.b32.xlu0 %v833, 8
      %v958 = vpop.permute.xlu0 %957
      %959 = vrot.lane.b32.xlu0 %v835, 8
      %v960 = vpop.permute.xlu0 %959
      %v965 = vsel %vm400, %v949, %v954
      %v966 = vsel %vm400, %v950, %v956
      %v967 = vsel %vm400, %v951, %v958
      %v968 = vsel %vm400, %v952, %v960
      %v969 = vld [vmem:[%s381] sm:$0x1]
      %v970 = vadd.s32 %v839, 8
      %v971 = vlaneseq
      %v972 = vshrl.u32 %v971, 7
      %v973 = vsub.s32 0, %v972
      %v974 = vrot.slane %v969, %v973
      %vm975 = vcmp.eq.s32.totalorder %v839, %v974
      %vm976 = vcmp.eq.s32.totalorder %v970, %v974
      %v977 = vsel %vm975, 1, 0
      %v978 = vsel %vm976, 1, 0
      %v979 = vcvt.s32.f32 %v977
      %v980 = vcvt.s32.f32 %v978
      %vm981 = vcmask 261120
      %v983 = vsel %vm981, %v979, 0
      %v986 = vsel %vm981, %v980, 0
      %988 = vmatprep.subr.mxu0 0.0
      %989 = vmatpush1.msra.mxu0 %v965
      %990 = vmatprep.subr.mxu0 0.0
      %991 = vmatpush1.msra.mxu0 %v966
      %992 = vmatprep.subr.mxu0 0.0
      %993 = vmatpush1.msra.mxu0 %v967
      %994 = vmatprep.subr.mxu0 0.0
      %995 = vmatpush1.msra.mxu0 %v968
      %996 = vmatprep.subr.mxu0 0.0
      %997 = vmatpush1.msra.mxu0 0.0
      %998 = vmatprep.subr.mxu0 0.0
      %999 = vmatpush1.msra.mxu0 0.0
      %1000 = vmatprep.subr.mxu0 0.0
      %1001 = vmatpush1.msra.mxu0 0.0
      %1002 = vmatprep.subr.mxu0 0.0
      %1003 = vmatpush1.msra.mxu0 0.0
      %1004 = vmatprep.subr.mxu0 0.0
      %1005 = vmatpush1.msra.mxu0 0.0
      %1006 = vmatprep.subr.mxu0 0.0
      %1007 = vmatpush1.msra.mxu0 0.0
      %1008 = vmatprep.subr.mxu0 0.0
      %1009 = vmatpush1.msra.mxu0 0.0
      %1010 = vmatprep.subr.mxu0 0.0
      %1011 = vmatpush1.msra.mxu0 0.0
      %1012 = vmatprep.subr.mxu0 0.0
      %1013 = vmatpush1.msra.mxu0 0.0
      %1014 = vmatprep.subr.mxu0 0.0
      %1015 = vmatpush1.msra.mxu0 0.0
      %1016 = vmatprep.subr.mxu0 0.0
      %1017 = vmatpush1.msra.mxu0 0.0
      %1018 = vmatprep.subr.mxu0 0.0
      %1019 = vmatpush1.msra.mxu0 0.0
      %1020 = vmatprep.subr.mxu0 0.0
      %1021 = vmatpush1.msra.mxu0 0.0
      %1022 = vmatprep.subr.mxu0 0.0
      %1023 = vmatpush1.msra.mxu0 0.0
      %1024 = vmatprep.subr.mxu0 0.0
      %1025 = vmatpush1.msra.mxu0 0.0
      %1026 = vmatprep.subr.mxu0 0.0
      %1027 = vmatpush1.msra.mxu0 0.0
      %1028 = vmatprep.subr.mxu0 0.0
      %1029 = vmatpush1.msra.mxu0 0.0
      %1030 = vmatprep.subr.mxu0 0.0
      %1031 = vmatpush1.msra.mxu0 0.0
      %1032 = vmatprep.subr.mxu0 0.0
      %1033 = vmatpush1.msra.mxu0 0.0
      %1034 = vmatprep.subr.mxu0 0.0
      %1035 = vmatpush1.msra.mxu0 0.0
      %1036 = vmatprep.subr.mxu0 0.0
      %1037 = vmatpush1.msra.mxu0 0.0
      %1038 = vmatprep.subr.mxu0 0.0
      %1039 = vmatpush1.msra.mxu0 0.0
      %1040 = vmatprep.subr.mxu0 0.0
      %1041 = vmatpush1.msra.mxu0 0.0
      %1042 = vmatprep.subr.mxu0 0.0
      %1043 = vmatpush1.msra.mxu0 0.0
      %1044 = vmatprep.subr.mxu0 0.0
      %1045 = vmatpush1.msra.mxu0 0.0
      %1046 = vmatprep.subr.mxu0 0.0
      %1047 = vmatpush1.msra.mxu0 0.0
      %1048 = vmatprep.subr.mxu0 0.0
      %1049 = vmatpush1.msra.mxu0 0.0
      %1050 = vmatprep.subr.mxu0 0.0
      %1051 = vmatpush1.msra.mxu0 0.0
      %1052 = vmatprep.mubr.f32.mxu0 0.0
      %1053 = vmatmul.mubr.f32.gmra.mrb[0].mxu0 %v983
      %v1054 = vpop.f32.mrb[0].mxu0
      %v1055 = vadd.f32 0.0, %v1054
      %v1056 = vpop.f32.mrb[0].mxu0
      %1057 = vmatprep.mubr.f32.mxu0 0.0
      %1058 = vmatmul.mubr.f32.gmra.mrb[0].mxu0 %v986
      %v1059 = vpop.f32.mrb[0].mxu0
      %v1060 = vadd.f32 0.0, %v1059
      %v1061 = vpop.f32.mrb[0].mxu0
      %1062 = vdwg.mxu0
      %1065 = vrot.lane.b32.xlu0 %v1055, 120
      %v1066 = vpop.permute.xlu0 %1065
      %1067 = vrot.lane.b32.xlu0 %v1060, 120
      %v1068 = vpop.permute.xlu0 %1067
      %v1069 = vsel %vm810, %v1066, 0
      %v1071 = vsel %vm810, %v1068, 0
      %1073 = vmatprep.subr.mxu0 0.0
      %1074 = vmatpush1.msra.mxu0 %v862
      %1075 = vmatprep.subr.mxu0 0.0
      %1076 = vmatpush1.msra.mxu0 0.0
      %1077 = vmatprep.subr.mxu0 0.0
      %1078 = vmatpush1.msra.mxu0 0.0
      %1079 = vmatprep.subr.mxu0 0.0
      %1080 = vmatpush1.msra.mxu0 0.0
      %1081 = vmatprep.subr.mxu0 0.0
      %1082 = vmatpush1.msra.mxu0 0.0
      %1083 = vmatprep.subr.mxu0 0.0
      %1084 = vmatpush1.msra.mxu0 0.0
      %1085 = vmatprep.subr.mxu0 0.0
      %1086 = vmatpush1.msra.mxu0 0.0
      %1087 = vmatprep.subr.mxu0 0.0
      %1088 = vmatpush1.msra.mxu0 0.0
      %1089 = vmatprep.subr.mxu0 0.0
      %1090 = vmatpush1.msra.mxu0 0.0
      %1091 = vmatprep.subr.mxu0 0.0
      %1092 = vmatpush1.msra.mxu0 0.0
      %1093 = vmatprep.subr.mxu0 0.0
      %1094 = vmatpush1.msra.mxu0 0.0
      %1095 = vmatprep.subr.mxu0 0.0
      %1096 = vmatpush1.msra.mxu0 0.0
      %1097 = vmatprep.subr.mxu0 0.0
      %1098 = vmatpush1.msra.mxu0 0.0
      %1099 = vmatprep.subr.mxu0 0.0
      %1100 = vmatpush1.msra.mxu0 0.0
      %1101 = vmatprep.subr.mxu0 0.0
      %1102 = vmatpush1.msra.mxu0 0.0
      %1103 = vmatprep.subr.mxu0 0.0
      %1104 = vmatpush1.msra.mxu0 0.0
      %1105 = vmatprep.subr.mxu0 0.0
      %1106 = vmatpush1.msra.mxu0 0.0
      %1107 = vmatprep.subr.mxu0 0.0
      %1108 = vmatpush1.msra.mxu0 0.0
      %1109 = vmatprep.subr.mxu0 0.0
      %1110 = vmatpush1.msra.mxu0 0.0
      %1111 = vmatprep.subr.mxu0 0.0
      %1112 = vmatpush1.msra.mxu0 0.0
      %1113 = vmatprep.subr.mxu0 0.0
      %1114 = vmatpush1.msra.mxu0 0.0
      %1115 = vmatprep.subr.mxu0 0.0
      %1116 = vmatpush1.msra.mxu0 0.0
      %1117 = vmatprep.subr.mxu0 0.0
      %1118 = vmatpush1.msra.mxu0 0.0
      %1119 = vmatprep.subr.mxu0 0.0
      %1120 = vmatpush1.msra.mxu0 0.0
      %1121 = vmatprep.subr.mxu0 0.0
      %1122 = vmatpush1.msra.mxu0 0.0
      %1123 = vmatprep.subr.mxu0 0.0
      %1124 = vmatpush1.msra.mxu0 0.0
      %1125 = vmatprep.subr.mxu0 0.0
      %1126 = vmatpush1.msra.mxu0 0.0
      %1127 = vmatprep.subr.mxu0 0.0
      %1128 = vmatpush1.msra.mxu0 0.0
      %1129 = vmatprep.subr.mxu0 0.0
      %1130 = vmatpush1.msra.mxu0 0.0
      %1131 = vmatprep.subr.mxu0 0.0
      %1132 = vmatpush1.msra.mxu0 0.0
      %1133 = vmatprep.subr.mxu0 0.0
      %1134 = vmatpush1.msra.mxu0 0.0
      %1135 = vmatprep.subr.mxu0 0.0
      %1136 = vmatpush1.msra.mxu0 0.0
      %1137 = vmatprep.mubr.f32.mxu0 0.0
      %1138 = vmatmul.mubr.f32.gmra.mrb[0].mxu0 %v1069
      %v1139 = vpop.f32.mrb[0].mxu0
      %v1140 = vadd.f32 1e-08, %v1139
      %v1141 = vpop.f32.mrb[0].mxu0
      %1142 = vmatprep.mubr.f32.mxu0 0.0
      %1143 = vmatmul.mubr.f32.gmra.mrb[0].mxu0 %v1071
      %v1144 = vpop.f32.mrb[0].mxu0
      %v1145 = vadd.f32 1e-08, %v1144
      %v1146 = vpop.f32.mrb[0].mxu0
      %1147 = vdwg.mxu0
      %v1148 = vrcp.pop %v1140
      %v1149 = vmul.f32 %v1055, %v1148
      %v1150 = vrcp.pop %v1145
      %v1151 = vmul.f32 %v1060, %v1150
      %1152 = vst.msk [vmem:[%s386] sm:$0xff] %vm400, %v1149
      %1153 = vst.msk [vmem:[%s386 + $0x8] sm:$0xff] %vm400, %v1151
      %p1154 = scmp.lt.s32.totalorder %s20, 1
      %s1155 = scalar_select %p1154, %s20, 1
      %s1156 = smul.addr %s1155, 2
      %s1157 = smul.addr %s1156, 8
      %s1158 = scalar_lea.vmem %s9, %s1157
      // Predicated region
      $region57: #{multi_head_gat.1} parent=55 // pred_check
        %p1159 = pneg %p247
      $region58: #{multi_head_gat.1} parent=55 // pred_check_branch
        %1161 = sbr.rel (%p1159) target = $region60
      $region59: #{multi_head_gat.1} parent=55 // pred_region
        _
      $region60: #{multi_head_gat.1} parent=55 // pred_fallthru
        _
    $region56: #{multi_head_gat.1} parent=5 // pred_fallthru
      _
    %p1162 = scmp.le.s32.totalorder 2, %s15
    // Predicated region
    $region61: #{multi_head_gat.1} parent=5 // pred_check
      %p1163 = pneg %p1162
    $region62: #{multi_head_gat.1} parent=5 // pred_check_branch
      %1165 = sbr.rel (%p1163) target = $region64
    $region63: #{multi_head_gat.1} parent=5 // pred_region
      %s1166 = ssub.s32 %s15, 2
      // Predicated region
      $region65: #{multi_head_gat.1} parent=63 // pred_check
        %p1167 = pneg %p253
      $region66: #{multi_head_gat.1} parent=63 // pred_check_branch
        %1169 = sbr.rel (%p1167) target = $region68
      $region67: #{multi_head_gat.1} parent=63 // pred_region
        %p1170 = scmp.lt.s32.totalorder %s21, 1
        %s1171 = scalar_select %p1170, %s21, 1
        %s1172 = smul.addr %s1171, 2
        %s1173 = smul.addr %s1172, 8
        %s1174 = scalar_lea.vmem %s9, %s1173
      $region68: #{multi_head_gat.1} parent=63 // pred_fallthru
        _
    $region64: #{multi_head_gat.1} parent=5 // pred_fallthru
      _
  $region6: #{multi_head_gat.1} parent=0 // loop_footer
    %s19 = sadd.s32 1, %s15
  $region7: #{multi_head_gat.1} parent=0 // loop_footer_branch
    %14 = sbr.rel target = $region3
  $region8: #{multi_head_gat.1} parent=0 // loop_exit
    _

</llo_original>
